<compile_context>
chip_gen: v7x
topology: tpu7x:2x2x1
jax: 0.10.0
libtpu: 0.0.40
codegen_flags: <defaults>
</compile_context>

<pallas_src>
import functools
import math

import jax
import jax.numpy as jnp
from jax.experimental import pallas as pl
from jax.experimental.pallas import tpu as pltpu


def _round_up(n, m):
    return ((n + m - 1) // m) * m


def _cdiv(a, b):
    return -(-a // b)


def _fused_mlp_kernel(*refs, plan, mxu_dtype):
    """Fused MLP forward.

    refs layout: [x, (w_chunk_0..w_chunk_{k-1}, b) per layer..., out]
    plan: static tuple of (n_weight_chunks, apply_relu) per layer.

    Activations are [TB, K_pad] slabs, weights [K_pad, N_pad], biases [1, N_pad];
    all fully VMEM-resident.  The layer loop is unrolled at trace time so
    intermediates never touch HBM.  Matmul operands are cast to `mxu_dtype`
    (bf16 in production) with an f32 accumulator.
    """
    x_ref = refs[0]
    out_ref = refs[-1]
    p_refs = refs[1:-1]

    x_mxu = x_ref[...].astype(mxu_dtype)
    idx = 0
    y_prev_mxu = None   # PyTorch's y_p[0]
    y_cur = None        # PyTorch's y_l (f32 accumulator)
    y_cur_mxu = None
    for li, (n_chunks, apply_relu) in enumerate(plan):
        ws = [p_refs[idx + c][...] for c in range(n_chunks)]          # mxu_dtype
        b = p_refs[idx + n_chunks][...].astype(jnp.float32)           # (1, N_pad)
        idx += n_chunks + 1

        if li == 0:
            chunks = [x_mxu]                      # first layer sees raw input
        elif n_chunks == 1:
            chunks = [y_cur_mxu]                  # no skip connections
        elif n_chunks == 2:
            chunks = [y_cur_mxu, x_mxu]           # skip path, first loop iter
        else:
            chunks = [y_prev_mxu, y_cur_mxu, x_mxu]   # skip path, later iters

        # cat([...]) @ W  ==  sum of per-chunk matmuls (no concat materialized).
        acc = b
        for a, w in zip(chunks, ws):
            acc = acc + jnp.dot(a, w, preferred_element_type=jnp.float32)
        if apply_relu:
            acc = jnp.maximum(acc, 0.0)

        y_prev_mxu = y_cur_mxu
        y_cur = acc
        y_cur_mxu = acc.astype(mxu_dtype)

    out_ref[...] = y_cur.astype(out_ref.dtype)


def init_linear(key, n_in, n_out, dtype=jnp.float32):
    """PyTorch nn.Linear default init (U(-k, k), k = 1/sqrt(n_in)).

    Weight is returned transposed to (n_in, n_out) for the x @ W kernel layout.
    """
    kw, kb = jax.random.split(key)
    bound = 1.0 / math.sqrt(n_in)
    w = jax.random.uniform(kw, (n_in, n_out), dtype, minval=-bound, maxval=bound)
    b = jax.random.uniform(kb, (n_out,), dtype, minval=-bound, maxval=bound)
    return w, b


class FullyConnectedPallas:
    """JAX/Pallas re-implementation of quantnn FullyConnected (batch_norm=False)."""

    def __init__(self, key, n_inputs, n_outputs, n_layers, width,
                 skip_connections=False, dtype=jnp.float32,
                 mxu_dtype=jnp.bfloat16):
        assert n_layers >= 1
        self.skips = skip_connections
        self.n_inputs = n_inputs
        self.n_outputs = n_outputs
        self.dtype = dtype
        self.mxu_dtype = mxu_dtype

        nominal = width
        if self.skips:
            nominal = (nominal - n_inputs) // 2
            assert nominal > 0, (
                "skip_connections=True requires width > n_inputs + 1 "
                "(nominal hidden width would be <= 0)")

        # Lane-dense padded widths per activation role.
        self.F_in = _round_up(n_inputs, 128)
        self.F_hid = _round_up(nominal, 128)
        self.F_out = _round_up(n_outputs, 128)

        # Per-layer structure: input chunks (role, size) in PyTorch cat order
        # [prev, cur, x], output size, padded output width, ReLU flag.
        layer_defs = []
        for i in range(n_layers + 1):
            is_last = (i == n_layers)
            n_out = n_outputs if is_last else nominal
            n_out_pad = self.F_out if is_last else self.F_hid
            if i == 0:
                chunks = (("x", n_inputs),)
            elif self.skips:
                if i == 1:
                    chunks = (("h", nominal), ("x", n_inputs))
                else:
                    chunks = (("h", nominal), ("h", nominal), ("x", n_inputs))
            else:
                chunks = (("h", nominal),)
            layer_defs.append((chunks, n_out, n_out_pad, not is_last))
        self.layer_defs = layer_defs
        self.plan = tuple((len(cs), relu) for cs, _, _, relu in layer_defs)

        def kpad(role):
            return self.F_in if role == "x" else self.F_hid

        # Initialize parameters (matching nn.Linear defaults on the FULL fan-in)
        # and pre-pad ONCE: weights to [K_pad, N_pad] in mxu_dtype, bias to
        # [1, N_pad] in f32.
        keys = jax.random.split(key, n_layers + 1)
        self.params = []         # unpadded f32: ([chunk weights], bias) — for the reference
        self.padded_params = []  # padded: ([ [K_pad,N_pad] slabs ], [1,N_pad] bias)
        for (chunks, n_out, n_out_pad, _), k in zip(layer_defs, keys):
            n_in_total = sum(c for _, c in chunks)
            w_full, b = init_linear(k, n_in_total, n_out, dtype)
            w_chunks, offs = [], 0
            for _, c in chunks:                 # split rows in cat order [prev, cur, x]
                w_chunks.append(w_full[offs:offs + c, :])
                offs += c
            self.params.append((w_chunks, b))
            w_pad = [jnp.pad(w, ((0, kpad(role) - w.shape[0]),
                                 (0, n_out_pad - w.shape[1]))).astype(mxu_dtype)
                     for (role, _), w in zip(chunks, w_chunks)]
            b_pad = jnp.pad(b, (0, n_out_pad - n_out)).reshape(1, n_out_pad)
            self.padded_params.append((w_pad, b_pad))

    def _vmem_limit_bytes(self, TB):
        """Explicit scoped-VMEM budget for the fused call."""
        w_bytes = 0
        for w_pads, b_pad in self.padded_params:
            w_bytes += sum(w.size * w.dtype.itemsize for w in w_pads)
            w_bytes += b_pad.size * b_pad.dtype.itemsize
        resident = 2 * w_bytes                                   # pipeline double-buffer
        streamed = 2 * TB * self.F_in * 4 + 2 * TB * self.F_out * 4
        live = 4 * TB * max(self.F_in, self.F_hid, self.F_out) * 4
        budget = int(1.5 * (resident + streamed + live)) + (2 << 20)
        return min(max(budget, 32 << 20), 128 << 20)

    def __call__(self, x):
        B = x.shape[0]
        b8 = _round_up(B, 8)
        if b8 <= 8:
            n_tiles, TB = 1, b8
        else:
            # >= 2 balanced tiles so both v7x TensorCores get work; each tile
            # <= 512 rows and a multiple of 8 (avoids padding B to the next
            # 512 boundary when it is just above one).
            n_tiles = max(2, _cdiv(b8, 512))
            TB = _round_up(_cdiv(b8, n_tiles), 8)
        Bp = TB * n_tiles

        x_pad = jnp.pad(x.astype(self.dtype),
                        ((0, Bp - B), (0, self.F_in - self.n_inputs)))

        inputs = [x_pad]
        in_specs = [pl.BlockSpec((TB, self.F_in), lambda i: (i, 0))]
        for w_pads, b_pad in self.padded_params:
            for w in w_pads:
                inputs.append(w)
                in_specs.append(pl.BlockSpec(w.shape, lambda i: (0, 0)))
            inputs.append(b_pad)
            in_specs.append(pl.BlockSpec(b_pad.shape, lambda i: (0, 0)))

        kernel = functools.partial(_fused_mlp_kernel, plan=self.plan,
                                   mxu_dtype=self.mxu_dtype)
        out_pad = pl.pallas_call(
            kernel,
            out_shape=jax.ShapeDtypeStruct((Bp, self.F_out), self.dtype),
            grid=(n_tiles,),
            in_specs=in_specs,
            out_specs=pl.BlockSpec((TB, self.F_out), lambda i: (i, 0)),
            compiler_params=pltpu.CompilerParams(
                dimension_semantics=("parallel",),
                vmem_limit_bytes=self._vmem_limit_bytes(TB)),
        )(*inputs)
        return out_pad[:B, :self.n_outputs]


def reference_forward(model, x):
    """Pure-JAX f32 reference mirroring the PyTorch forward (with real concat)."""
    y_p = []
    y_l = None
    for li, ((w_chunks, b), (_, _, _, relu)) in enumerate(
            zip(model.params, model.layer_defs)):
        w_full = jnp.concatenate(w_chunks, axis=0)
        if li == 0:
            y = x
        elif model.skips:
            y = jnp.concatenate(y_p + [y_l, x], axis=1)
            y_p = [y_l]
        else:
            y = y_l
        z = y @ w_full + b
        if relu:
            z = jnp.maximum(z, 0.0)
        y_l = z
    return y_l


if __name__ == "__main__":
    key = jax.random.PRNGKey(0)
    k_in, k_a, k_b = jax.random.split(key, 3)

    batch = 8
    n_inputs, n_outputs, n_layers, width = 16, 8, 3, 32

    x = jax.random.normal(k_in, (batch, n_inputs), dtype=jnp.float32)

    # --- exact f32 debug path (bit-level check vs. concat-based reference) ---
    for skips, k in ((False, k_a), (True, k_b)):
        m32 = FullyConnectedPallas(k, n_inputs, n_outputs, n_layers, width,
                                   skip_connections=skips,
                                   mxu_dtype=jnp.float32)
        out32 = jax.block_until_ready(m32(x))
        ref32 = reference_forward(m32, x)
        assert out32.shape == (batch, n_outputs)
        assert jnp.allclose(out32, ref32, atol=1e-4, rtol=1e-4), \
            f"f32 mismatch (skips={skips})"

    # --- production bf16-MXU path (looser tolerance vs. f32 reference) ---
    for skips, k in ((False, k_a), (True, k_b)):
        mbf = FullyConnectedPallas(k, n_inputs, n_outputs, n_layers, width,
                                   skip_connections=skips,
                                   mxu_dtype=jnp.bfloat16)
        outbf = jax.block_until_ready(mbf(x))
        refbf = reference_forward(mbf, x)
        assert outbf.shape == (batch, n_outputs)
        assert jnp.allclose(outbf, refbf, atol=5e-2, rtol=5e-2), \
            f"bf16 mismatch (skips={skips})"

    print("KERNEL_OK")
</pallas_src>

<mosaic_0001>
module attributes {stable_mosaic.version = 11 : i64} {
  func.func @_fused_mlp_kernel(%arg0: i32, %arg1: memref<8x128xf32, #tpu.memory_space<vmem>>, %arg2: memref<128x128xf32, #tpu.memory_space<vmem>>, %arg3: memref<1x128xf32, #tpu.memory_space<vmem>>, %arg4: memref<128x128xf32, #tpu.memory_space<vmem>>, %arg5: memref<1x128xf32, #tpu.memory_space<vmem>>, %arg6: memref<128x128xf32, #tpu.memory_space<vmem>>, %arg7: memref<1x128xf32, #tpu.memory_space<vmem>>, %arg8: memref<128x128xf32, #tpu.memory_space<vmem>>, %arg9: memref<1x128xf32, #tpu.memory_space<vmem>>, %arg10: memref<8x128xf32, #tpu.memory_space<vmem>>) attributes {dimension_semantics = [#tpu.dimension_semantics<parallel>], iteration_bounds = array<i64: 1>, scalar_prefetch = 0 : i64, scratch_operands = 0 : i64, tpu.core_type = #tpu.core_type<tc>, window_params = [{transform_indices = @transform_0, window_bounds = array<i64: 8, 128>}, {pipeline_mode = #tpu.pipeline_mode<synchronous>, transform_indices = @transform_1, window_bounds = array<i64: 128, 128>}, {pipeline_mode = #tpu.pipeline_mode<synchronous>, transform_indices = @transform_2, window_bounds = array<i64: 1, 128>}, {pipeline_mode = #tpu.pipeline_mode<synchronous>, transform_indices = @transform_3, window_bounds = array<i64: 128, 128>}, {pipeline_mode = #tpu.pipeline_mode<synchronous>, transform_indices = @transform_4, window_bounds = array<i64: 1, 128>}, {pipeline_mode = #tpu.pipeline_mode<synchronous>, transform_indices = @transform_5, window_bounds = array<i64: 128, 128>}, {pipeline_mode = #tpu.pipeline_mode<synchronous>, transform_indices = @transform_6, window_bounds = array<i64: 1, 128>}, {pipeline_mode = #tpu.pipeline_mode<synchronous>, transform_indices = @transform_7, window_bounds = array<i64: 128, 128>}, {pipeline_mode = #tpu.pipeline_mode<synchronous>, transform_indices = @transform_8, window_bounds = array<i64: 1, 128>}, {transform_indices = @transform_9, window_bounds = array<i64: 8, 128>}]} {
    %c0 = arith.constant 0 : index
    %c0_0 = arith.constant 0 : index
    %0 = vector.load %arg1[%c0, %c0_0] : memref<8x128xf32, #tpu.memory_space<vmem>>, vector<8x128xf32>
    %c0_1 = arith.constant 0 : index
    %c0_2 = arith.constant 0 : index
    %1 = vector.load %arg2[%c0_1, %c0_2] : memref<128x128xf32, #tpu.memory_space<vmem>>, vector<128x128xf32>
    %c0_3 = arith.constant 0 : index
    %c0_4 = arith.constant 0 : index
    %2 = vector.load %arg3[%c0_3, %c0_4] : memref<1x128xf32, #tpu.memory_space<vmem>>, vector<1x128xf32>
    %cst = arith.constant dense<0.000000e+00> : vector<8x128xf32>
    %3 = tpu.matmul %0, %1, %cst {dimension_numbers = #tpu.dot_dimension_numbers<[1], [0], [0], [1], [0, 0, 1, 1], [], []>} : vector<8x128xf32>, vector<128x128xf32>, vector<8x128xf32> -> vector<8x128xf32>
    %4 = vector.broadcast %2 : vector<1x128xf32> to vector<8x128xf32>
    %5 = arith.addf %4, %3 : vector<8x128xf32>
    %cst_5 = arith.constant 0.000000e+00 : f32
    %6 = vector.broadcast %cst_5 : f32 to vector<8x128xf32>
    %7 = arith.maximumf %5, %6 : vector<8x128xf32>
    %c0_6 = arith.constant 0 : index
    %c0_7 = arith.constant 0 : index
    %8 = vector.load %arg4[%c0_6, %c0_7] : memref<128x128xf32, #tpu.memory_space<vmem>>, vector<128x128xf32>
    %c0_8 = arith.constant 0 : index
    %c0_9 = arith.constant 0 : index
    %9 = vector.load %arg5[%c0_8, %c0_9] : memref<1x128xf32, #tpu.memory_space<vmem>>, vector<1x128xf32>
    %cst_10 = arith.constant dense<0.000000e+00> : vector<8x128xf32>
    %10 = tpu.matmul %7, %8, %cst_10 {dimension_numbers = #tpu.dot_dimension_numbers<[1], [0], [0], [1], [0, 0, 1, 1], [], []>} : vector<8x128xf32>, vector<128x128xf32>, vector<8x128xf32> -> vector<8x128xf32>
    %11 = vector.broadcast %9 : vector<1x128xf32> to vector<8x128xf32>
    %12 = arith.addf %11, %10 : vector<8x128xf32>
    %cst_11 = arith.constant 0.000000e+00 : f32
    %13 = vector.broadcast %cst_11 : f32 to vector<8x128xf32>
    %14 = arith.maximumf %12, %13 : vector<8x128xf32>
    %c0_12 = arith.constant 0 : index
    %c0_13 = arith.constant 0 : index
    %15 = vector.load %arg6[%c0_12, %c0_13] : memref<128x128xf32, #tpu.memory_space<vmem>>, vector<128x128xf32>
    %c0_14 = arith.constant 0 : index
    %c0_15 = arith.constant 0 : index
    %16 = vector.load %arg7[%c0_14, %c0_15] : memref<1x128xf32, #tpu.memory_space<vmem>>, vector<1x128xf32>
    %cst_16 = arith.constant dense<0.000000e+00> : vector<8x128xf32>
    %17 = tpu.matmul %14, %15, %cst_16 {dimension_numbers = #tpu.dot_dimension_numbers<[1], [0], [0], [1], [0, 0, 1, 1], [], []>} : vector<8x128xf32>, vector<128x128xf32>, vector<8x128xf32> -> vector<8x128xf32>
    %18 = vector.broadcast %16 : vector<1x128xf32> to vector<8x128xf32>
    %19 = arith.addf %18, %17 : vector<8x128xf32>
    %cst_17 = arith.constant 0.000000e+00 : f32
    %20 = vector.broadcast %cst_17 : f32 to vector<8x128xf32>
    %21 = arith.maximumf %19, %20 : vector<8x128xf32>
    %c0_18 = arith.constant 0 : index
    %c0_19 = arith.constant 0 : index
    %22 = vector.load %arg8[%c0_18, %c0_19] : memref<128x128xf32, #tpu.memory_space<vmem>>, vector<128x128xf32>
    %c0_20 = arith.constant 0 : index
    %c0_21 = arith.constant 0 : index
    %23 = vector.load %arg9[%c0_20, %c0_21] : memref<1x128xf32, #tpu.memory_space<vmem>>, vector<1x128xf32>
    %cst_22 = arith.constant dense<0.000000e+00> : vector<8x128xf32>
    %24 = tpu.matmul %21, %22, %cst_22 {dimension_numbers = #tpu.dot_dimension_numbers<[1], [0], [0], [1], [0, 0, 1, 1], [], []>} : vector<8x128xf32>, vector<128x128xf32>, vector<8x128xf32> -> vector<8x128xf32>
    %25 = vector.broadcast %23 : vector<1x128xf32> to vector<8x128xf32>
    %26 = arith.addf %25, %24 : vector<8x128xf32>
    %c0_23 = arith.constant 0 : index
    %c0_24 = arith.constant 0 : index
    %27 = vector.load %arg10[%c0_23, %c0_24] : memref<8x128xf32, #tpu.memory_space<vmem>>, vector<8x128xf32>
    tpu.vector_store %arg10[%c0_23, %c0_24], %26 {strides = array<i32>} : memref<8x128xf32, #tpu.memory_space<vmem>>, vector<8x128xf32>,
    return
  }
  func.func @transform_0(%arg0: i32) -> (i32, i32) {
    %c0_i32 = arith.constant 0 : i32
    %c0_i32_0 = arith.constant 0 : i32
    return %arg0, %c0_i32 : i32, i32
  }
  func.func @transform_1(%arg0: i32) -> (i32, i32) {
    %c0_i32 = arith.constant 0 : i32
    %c0_i32_0 = arith.constant 0 : i32
    %c0_i32_1 = arith.constant 0 : i32
    return %c0_i32, %c0_i32_0 : i32, i32
  }
  func.func @transform_2(%arg0: i32) -> (i32, i32) {
    %c0_i32 = arith.constant 0 : i32
    %c0_i32_0 = arith.constant 0 : i32
    %c0_i32_1 = arith.constant 0 : i32
    return %c0_i32, %c0_i32_0 : i32, i32
  }
  func.func @transform_3(%arg0: i32) -> (i32, i32) {
    %c0_i32 = arith.constant 0 : i32
    %c0_i32_0 = arith.constant 0 : i32
    %c0_i32_1 = arith.constant 0 : i32
    return %c0_i32, %c0_i32_0 : i32, i32
  }
  func.func @transform_4(%arg0: i32) -> (i32, i32) {
    %c0_i32 = arith.constant 0 : i32
    %c0_i32_0 = arith.constant 0 : i32
    %c0_i32_1 = arith.constant 0 : i32
    return %c0_i32, %c0_i32_0 : i32, i32
  }
  func.func @transform_5(%arg0: i32) -> (i32, i32) {
    %c0_i32 = arith.constant 0 : i32
    %c0_i32_0 = arith.constant 0 : i32
    %c0_i32_1 = arith.constant 0 : i32
    return %c0_i32, %c0_i32_0 : i32, i32
  }
  func.func @transform_6(%arg0: i32) -> (i32, i32) {
    %c0_i32 = arith.constant 0 : i32
    %c0_i32_0 = arith.constant 0 : i32
    %c0_i32_1 = arith.constant 0 : i32
    return %c0_i32, %c0_i32_0 : i32, i32
  }
  func.func @transform_7(%arg0: i32) -> (i32, i32) {
    %c0_i32 = arith.constant 0 : i32
    %c0_i32_0 = arith.constant 0 : i32
    %c0_i32_1 = arith.constant 0 : i32
    return %c0_i32, %c0_i32_0 : i32, i32
  }
  func.func @transform_8(%arg0: i32) -> (i32, i32) {
    %c0_i32 = arith.constant 0 : i32
    %c0_i32_0 = arith.constant 0 : i32
    %c0_i32_1 = arith.constant 0 : i32
    return %c0_i32, %c0_i32_0 : i32, i32
  }
  func.func @transform_9(%arg0: i32) -> (i32, i32) {
    %c0_i32 = arith.constant 0 : i32
    %c0_i32_0 = arith.constant 0 : i32
    return %arg0, %c0_i32 : i32, i32
  }
}

</mosaic_0001>

<llo_original>
// kernel: tpu_custom_call.1
$region0: #{tpu_custom_call.1}
  #allocation0 [shape = 'u32[]', space=smem, size = 0x4, offset = 0x4, fixed_abs, tag = 'smem constant byte address 0x4 - core index']
  #allocation1 [shape = 'u32[144,128]{1,0:T(1,128)}', space=vmem, size = 0x12000, scoped, tag = 'internal scratch']
  %s0 = inlined_call_operand.hbm [shape: f32[8,128], index: 0, kind: input, shape index: {}]
  %s1 = inlined_call_operand.hbm [shape: f32[128,128], index: 1, kind: input, shape index: {}]
  %s2 = inlined_call_operand.vmem [shape: f32[1,128], index: 2, kind: input, shape index: {}]
  %s3 = inlined_call_operand.hbm [shape: f32[128,128], index: 3, kind: input, shape index: {}]
  %s4 = inlined_call_operand.vmem [shape: f32[1,128], index: 4, kind: input, shape index: {}]
  %s5 = inlined_call_operand.hbm [shape: f32[128,128], index: 5, kind: input, shape index: {}]
  %s6 = inlined_call_operand.vmem [shape: f32[1,128], index: 6, kind: input, shape index: {}]
  %s7 = inlined_call_operand.hbm [shape: f32[128,128], index: 7, kind: input, shape index: {}]
  %s8 = inlined_call_operand.vmem [shape: f32[1,128], index: 8, kind: input, shape index: {}]
  %s9 = inlined_call_operand.hbm [shape: f32[8,128], index: 9, kind: output, shape index: {}]
  %s10 = sld [smem:[#allocation0]]
  $region66: #{tpu_custom_call.1} parent=0
    _
  %s12 = ssub.s32 1, %s10
  %s13 = scalar_select 0, %s12, %s10
  $region1: #{tpu_custom_call.1} parent=0
    #allocation2 [shape = 'u8[4096]{0}', space=vmem, size = 0x1000, scoped, tag = 'input window, operand 0, single buffered']
    #allocation3 [shape = 's32[1]{0}', space=sflag, size = 0x4, scoped, tag = 'scoped memory for tpu_custom_call.1']
    #allocation4 [shape = 's32[1]{0}', space=sflag, size = 0x4, scoped, tag = 'scoped memory for tpu_custom_call.1']
    #allocation5 [shape = 'u8[65536]{0}', space=vmem, size = 0x10000, scoped, tag = 'input window, operand 1, single buffered']
    #allocation6 [shape = 's32[1]{0}', space=sflag, size = 0x4, scoped, tag = 'scoped memory for tpu_custom_call.1']
    #allocation7 [shape = 'u8[65536]{0}', space=vmem, size = 0x10000, scoped, tag = 'input window, operand 3, single buffered']
    #allocation8 [shape = 'u8[65536]{0}', space=vmem, size = 0x10000, scoped, tag = 'input window, operand 5, single buffered']
    #allocation9 [shape = 's32[1]{0}', space=sflag, size = 0x4, scoped, tag = 'scoped memory for tpu_custom_call.1']
    #allocation10 [shape = 'u8[65536]{0}', space=vmem, size = 0x10000, scoped, tag = 'input window, operand 7, single buffered']
    #allocation11 [shape = 'u8[4096]{0}', space=vmem, size = 0x1000, scoped, tag = 'output window, operand 0, single buffered']
    %14 = vsyncpa [#allocation3], 0
    %15 = vsyncpa [#allocation6], 0
    %16 = vsyncpa [#allocation9], 0
    %17 = vsyncpa [#allocation4], 0
    // Predicated region
    $region2: #{tpu_custom_call.1} parent=1 // pred_check
      _
    $region3: #{tpu_custom_call.1} parent=1 // pred_check_branch
      %19 = sbr.rel (0) target = $region5
    $region4: #{tpu_custom_call.1} parent=1 // pred_region
      %s21 = ssub.s32 128, 128
      %22 = vsyncadd [#allocation3], %s21
      %s24 = sshll.u32 [#allocation2], 4
      %s25 = int_to_ptr.vmem [resolvable:$true] %s24
      %27 = dma.hbm_to_vmem [thread:$0]  %s0, 128, %s25, [#allocation3]
    $region5: #{tpu_custom_call.1} parent=1 // pred_fallthru
      _
    // Predicated region
    $region6: #{tpu_custom_call.1} parent=1 // pred_check
      _
    $region7: #{tpu_custom_call.1} parent=1 // pred_check_branch
      %29 = sbr.rel (0) target = $region9
    $region8: #{tpu_custom_call.1} parent=1 // pred_region
      %s31 = ssub.s32 2048, 2048
      %32 = vsyncadd [#allocation6], %s31
      %s33 = sshll.u32 [#allocation5], 4
      %s34 = int_to_ptr.vmem [resolvable:$true] %s33
      %39 = dma.hbm_to_vmem [thread:$0]  %s1, 2048, %s34, [#allocation6], 128, 128, 8
    $region9: #{tpu_custom_call.1} parent=1 // pred_fallthru
      _
    // Predicated region
    $region10: #{tpu_custom_call.1} parent=1 // pred_check
      _
    $region11: #{tpu_custom_call.1} parent=1 // pred_check_branch
      %41 = sbr.rel (0) target = $region13
    $region12: #{tpu_custom_call.1} parent=1 // pred_region
      _
    $region13: #{tpu_custom_call.1} parent=1 // pred_fallthru
      _
    // Predicated region
    $region14: #{tpu_custom_call.1} parent=1 // pred_check
      _
    $region15: #{tpu_custom_call.1} parent=1 // pred_check_branch
      %43 = sbr.rel (0) target = $region17
    $region16: #{tpu_custom_call.1} parent=1 // pred_region
      %s45 = ssub.s32 2048, 2048
      %46 = vsyncadd [#allocation6], %s45
      %s47 = sshll.u32 [#allocation7], 4
      %s48 = int_to_ptr.vmem [resolvable:$true] %s47
      %53 = dma.hbm_to_vmem [thread:$0]  %s3, 2048, %s48, [#allocation6], 128, 128, 8
    $region17: #{tpu_custom_call.1} parent=1 // pred_fallthru
      _
    // Predicated region
    $region18: #{tpu_custom_call.1} parent=1 // pred_check
      _
    $region19: #{tpu_custom_call.1} parent=1 // pred_check_branch
      %55 = sbr.rel (0) target = $region21
    $region20: #{tpu_custom_call.1} parent=1 // pred_region
      _
    $region21: #{tpu_custom_call.1} parent=1 // pred_fallthru
      _
    // Predicated region
    $region22: #{tpu_custom_call.1} parent=1 // pred_check
      _
    $region23: #{tpu_custom_call.1} parent=1 // pred_check_branch
      %57 = sbr.rel (0) target = $region25
    $region24: #{tpu_custom_call.1} parent=1 // pred_region
      %s59 = ssub.s32 2048, 2048
      %60 = vsyncadd [#allocation9], %s59
      %s61 = sshll.u32 [#allocation8], 4
      %s62 = int_to_ptr.vmem [resolvable:$true] %s61
      %67 = dma.hbm_to_vmem [thread:$0]  %s5, 2048, %s62, [#allocation9], 128, 128, 8
    $region25: #{tpu_custom_call.1} parent=1 // pred_fallthru
      _
    // Predicated region
    $region26: #{tpu_custom_call.1} parent=1 // pred_check
      _
    $region27: #{tpu_custom_call.1} parent=1 // pred_check_branch
      %69 = sbr.rel (0) target = $region29
    $region28: #{tpu_custom_call.1} parent=1 // pred_region
      _
    $region29: #{tpu_custom_call.1} parent=1 // pred_fallthru
      _
    // Predicated region
    $region30: #{tpu_custom_call.1} parent=1 // pred_check
      _
    $region31: #{tpu_custom_call.1} parent=1 // pred_check_branch
      %71 = sbr.rel (0) target = $region33
    $region32: #{tpu_custom_call.1} parent=1 // pred_region
      %s73 = ssub.s32 2048, 2048
      %74 = vsyncadd [#allocation9], %s73
      %s75 = sshll.u32 [#allocation10], 4
      %s76 = int_to_ptr.vmem [resolvable:$true] %s75
      %81 = dma.hbm_to_vmem [thread:$0]  %s7, 2048, %s76, [#allocation9], 128, 128, 8
    $region33: #{tpu_custom_call.1} parent=1 // pred_fallthru
      _
    // Predicated region
    $region34: #{tpu_custom_call.1} parent=1 // pred_check
      _
    $region35: #{tpu_custom_call.1} parent=1 // pred_check_branch
      %83 = sbr.rel (0) target = $region37
    $region36: #{tpu_custom_call.1} parent=1 // pred_region
      _
    $region37: #{tpu_custom_call.1} parent=1 // pred_fallthru
      _
    // Predicated region
    $region38: #{tpu_custom_call.1} parent=1 // pred_check
      _
    $region39: #{tpu_custom_call.1} parent=1 // pred_check_branch
      %85 = sbr.rel (0) target = $region41
    $region40: #{tpu_custom_call.1} parent=1 // pred_region
      %86 = dma.done [#allocation3], 128
    $region41: #{tpu_custom_call.1} parent=1 // pred_fallthru
      _
    // Predicated region
    $region42: #{tpu_custom_call.1} parent=1 // pred_check
      _
    $region43: #{tpu_custom_call.1} parent=1 // pred_check_branch
      %88 = sbr.rel (0) target = $region45
    $region44: #{tpu_custom_call.1} parent=1 // pred_region
      %89 = dma.done [#allocation6], 2048
    $region45: #{tpu_custom_call.1} parent=1 // pred_fallthru
      _
    // Predicated region
    $region46: #{tpu_custom_call.1} parent=1 // pred_check
      _
    $region47: #{tpu_custom_call.1} parent=1 // pred_check_branch
      %91 = sbr.rel (0) target = $region49
    $region48: #{tpu_custom_call.1} parent=1 // pred_region
      %92 = dma.done [#allocation6], 2048
    $region49: #{tpu_custom_call.1} parent=1 // pred_fallthru
      _
    // Predicated region
    $region50: #{tpu_custom_call.1} parent=1 // pred_check
      _
    $region51: #{tpu_custom_call.1} parent=1 // pred_check_branch
      %94 = sbr.rel (0) target = $region53
    $region52: #{tpu_custom_call.1} parent=1 // pred_region
      %95 = dma.done [#allocation9], 2048
    $region53: #{tpu_custom_call.1} parent=1 // pred_fallthru
      _
    // Predicated region
    $region54: #{tpu_custom_call.1} parent=1 // pred_check
      _
    $region55: #{tpu_custom_call.1} parent=1 // pred_check_branch
      %97 = sbr.rel (0) target = $region57
    $region56: #{tpu_custom_call.1} parent=1 // pred_region
      %98 = dma.done [#allocation9], 2048
    $region57: #{tpu_custom_call.1} parent=1 // pred_fallthru
      _
    %v99 = vld [vmem:[#allocation2] sm:$0xff]
    %v100 = vld [vmem:[#allocation5] sm:$0xff]
    %v101 = vld [vmem:[#allocation5 + $0x8] sm:$0xff]
    %v102 = vld [vmem:[#allocation5 + $0x10] sm:$0xff]
    %v103 = vld [vmem:[#allocation5 + $0x18] sm:$0xff]
    %v104 = vld [vmem:[#allocation5 + $0x20] sm:$0xff]
    %v105 = vld [vmem:[#allocation5 + $0x28] sm:$0xff]
    %v106 = vld [vmem:[#allocation5 + $0x30] sm:$0xff]
    %v107 = vld [vmem:[#allocation5 + $0x38] sm:$0xff]
    %v108 = vld [vmem:[#allocation5 + $0x40] sm:$0xff]
    %v109 = vld [vmem:[#allocation5 + $0x48] sm:$0xff]
    %v110 = vld [vmem:[#allocation5 + $0x50] sm:$0xff]
    %v111 = vld [vmem:[#allocation5 + $0x58] sm:$0xff]
    %v112 = vld [vmem:[#allocation5 + $0x60] sm:$0xff]
    %v113 = vld [vmem:[#allocation5 + $0x68] sm:$0xff]
    %v114 = vld [vmem:[#allocation5 + $0x70] sm:$0xff]
    %v115 = vld [vmem:[#allocation5 + $0x78] sm:$0xff]
    %v116 = vld [vmem:[%s2] sm:$0x1]
    %117 = vmatprep.subr.mxu0 0.0
    %118 = vmatpush1.msra.mxu0 %v100
    %119 = vmatprep.subr.mxu0 0.0
    %120 = vmatpush1.msra.mxu0 %v101
    %121 = vmatprep.subr.mxu0 0.0
    %122 = vmatpush1.msra.mxu0 %v102
    %123 = vmatprep.subr.mxu0 0.0
    %124 = vmatpush1.msra.mxu0 %v103
    %125 = vmatprep.subr.mxu0 0.0
    %126 = vmatpush1.msra.mxu0 %v104
    %127 = vmatprep.subr.mxu0 0.0
    %128 = vmatpush1.msra.mxu0 %v105
    %129 = vmatprep.subr.mxu0 0.0
    %130 = vmatpush1.msra.mxu0 %v106
    %131 = vmatprep.subr.mxu0 0.0
    %132 = vmatpush1.msra.mxu0 %v107
    %133 = vmatprep.subr.mxu0 0.0
    %134 = vmatpush1.msra.mxu0 %v108
    %135 = vmatprep.subr.mxu0 0.0
    %136 = vmatpush1.msra.mxu0 %v109
    %137 = vmatprep.subr.mxu0 0.0
    %138 = vmatpush1.msra.mxu0 %v110
    %139 = vmatprep.subr.mxu0 0.0
    %140 = vmatpush1.msra.mxu0 %v111
    %141 = vmatprep.subr.mxu0 0.0
    %142 = vmatpush1.msra.mxu0 %v112
    %143 = vmatprep.subr.mxu0 0.0
    %144 = vmatpush1.msra.mxu0 %v113
    %145 = vmatprep.subr.mxu0 0.0
    %146 = vmatpush1.msra.mxu0 %v114
    %147 = vmatprep.subr.mxu0 0.0
    %148 = vmatpush1.msra.mxu0 %v115
    %149 = vmatprep.subr.mxu0 0.0
    %150 = vmatpush1.msra.mxu0 0.0
    %151 = vmatprep.subr.mxu0 0.0
    %152 = vmatpush1.msra.mxu0 0.0
    %153 = vmatprep.subr.mxu0 0.0
    %154 = vmatpush1.msra.mxu0 0.0
    %155 = vmatprep.subr.mxu0 0.0
    %156 = vmatpush1.msra.mxu0 0.0
    %157 = vmatprep.subr.mxu0 0.0
    %158 = vmatpush1.msra.mxu0 0.0
    %159 = vmatprep.subr.mxu0 0.0
    %160 = vmatpush1.msra.mxu0 0.0
    %161 = vmatprep.subr.mxu0 0.0
    %162 = vmatpush1.msra.mxu0 0.0
    %163 = vmatprep.subr.mxu0 0.0
    %164 = vmatpush1.msra.mxu0 0.0
    %165 = vmatprep.subr.mxu0 0.0
    %166 = vmatpush1.msra.mxu0 0.0
    %167 = vmatprep.subr.mxu0 0.0
    %168 = vmatpush1.msra.mxu0 0.0
    %169 = vmatprep.subr.mxu0 0.0
    %170 = vmatpush1.msra.mxu0 0.0
    %171 = vmatprep.subr.mxu0 0.0
    %172 = vmatpush1.msra.mxu0 0.0
    %173 = vmatprep.subr.mxu0 0.0
    %174 = vmatpush1.msra.mxu0 0.0
    %175 = vmatprep.subr.mxu0 0.0
    %176 = vmatpush1.msra.mxu0 0.0
    %177 = vmatprep.subr.mxu0 0.0
    %178 = vmatpush1.msra.mxu0 0.0
    %179 = vmatprep.subr.mxu0 0.0
    %180 = vmatpush1.msra.mxu0 0.0
    %181 = vmatprep.mubr.f32.mxu0 0.0
    %182 = vmatmul.mubr.f32.gmra.mrb[0].mxu0 %v99
    %v183 = vpop.f32.mrb[0].mxu0
    %v184 = vadd.f32 0.0, %v183
    %v185 = vpop.f32.mrb[0].mxu0
    %186 = vdwg.mxu0
    %v188 = vlaneseq
    %v189 = vshrl.u32 %v188, 7
    %v190 = vsub.s32 0, %v189
    %v191 = vrot.slane %v116, %v190
    %v193 = vadd.f32 %v191, %v184
    %v194 = vmax.f32 %v193, 0.0
    %v195 = vld [vmem:[#allocation7] sm:$0xff]
    %v196 = vld [vmem:[#allocation7 + $0x8] sm:$0xff]
    %v197 = vld [vmem:[#allocation7 + $0x10] sm:$0xff]
    %v198 = vld [vmem:[#allocation7 + $0x18] sm:$0xff]
    %v199 = vld [vmem:[#allocation7 + $0x20] sm:$0xff]
    %v200 = vld [vmem:[#allocation7 + $0x28] sm:$0xff]
    %v201 = vld [vmem:[#allocation7 + $0x30] sm:$0xff]
    %v202 = vld [vmem:[#allocation7 + $0x38] sm:$0xff]
    %v203 = vld [vmem:[#allocation7 + $0x40] sm:$0xff]
    %v204 = vld [vmem:[#allocation7 + $0x48] sm:$0xff]
    %v205 = vld [vmem:[#allocation7 + $0x50] sm:$0xff]
    %v206 = vld [vmem:[#allocation7 + $0x58] sm:$0xff]
    %v207 = vld [vmem:[#allocation7 + $0x60] sm:$0xff]
    %v208 = vld [vmem:[#allocation7 + $0x68] sm:$0xff]
    %v209 = vld [vmem:[#allocation7 + $0x70] sm:$0xff]
    %v210 = vld [vmem:[#allocation7 + $0x78] sm:$0xff]
    %v211 = vld [vmem:[%s4] sm:$0x1]
    %212 = vmatprep.subr.mxu0 0.0
    %213 = vmatpush1.msra.mxu0 %v195
    %214 = vmatprep.subr.mxu0 0.0
    %215 = vmatpush1.msra.mxu0 %v196
    %216 = vmatprep.subr.mxu0 0.0
    %217 = vmatpush1.msra.mxu0 %v197
    %218 = vmatprep.subr.mxu0 0.0
    %219 = vmatpush1.msra.mxu0 %v198
    %220 = vmatprep.subr.mxu0 0.0
    %221 = vmatpush1.msra.mxu0 %v199
    %222 = vmatprep.subr.mxu0 0.0
    %223 = vmatpush1.msra.mxu0 %v200
    %224 = vmatprep.subr.mxu0 0.0
    %225 = vmatpush1.msra.mxu0 %v201
    %226 = vmatprep.subr.mxu0 0.0
    %227 = vmatpush1.msra.mxu0 %v202
    %228 = vmatprep.subr.mxu0 0.0
    %229 = vmatpush1.msra.mxu0 %v203
    %230 = vmatprep.subr.mxu0 0.0
    %231 = vmatpush1.msra.mxu0 %v204
    %232 = vmatprep.subr.mxu0 0.0
    %233 = vmatpush1.msra.mxu0 %v205
    %234 = vmatprep.subr.mxu0 0.0
    %235 = vmatpush1.msra.mxu0 %v206
    %236 = vmatprep.subr.mxu0 0.0
    %237 = vmatpush1.msra.mxu0 %v207
    %238 = vmatprep.subr.mxu0 0.0
    %239 = vmatpush1.msra.mxu0 %v208
    %240 = vmatprep.subr.mxu0 0.0
    %241 = vmatpush1.msra.mxu0 %v209
    %242 = vmatprep.subr.mxu0 0.0
    %243 = vmatpush1.msra.mxu0 %v210
    %244 = vmatprep.subr.mxu0 0.0
    %245 = vmatpush1.msra.mxu0 0.0
    %246 = vmatprep.subr.mxu0 0.0
    %247 = vmatpush1.msra.mxu0 0.0
    %248 = vmatprep.subr.mxu0 0.0
    %249 = vmatpush1.msra.mxu0 0.0
    %250 = vmatprep.subr.mxu0 0.0
    %251 = vmatpush1.msra.mxu0 0.0
    %252 = vmatprep.subr.mxu0 0.0
    %253 = vmatpush1.msra.mxu0 0.0
    %254 = vmatprep.subr.mxu0 0.0
    %255 = vmatpush1.msra.mxu0 0.0
    %256 = vmatprep.subr.mxu0 0.0
    %257 = vmatpush1.msra.mxu0 0.0
    %258 = vmatprep.subr.mxu0 0.0
    %259 = vmatpush1.msra.mxu0 0.0
    %260 = vmatprep.subr.mxu0 0.0
    %261 = vmatpush1.msra.mxu0 0.0
    %262 = vmatprep.subr.mxu0 0.0
    %263 = vmatpush1.msra.mxu0 0.0
    %264 = vmatprep.subr.mxu0 0.0
    %265 = vmatpush1.msra.mxu0 0.0
    %266 = vmatprep.subr.mxu0 0.0
    %267 = vmatpush1.msra.mxu0 0.0
    %268 = vmatprep.subr.mxu0 0.0
    %269 = vmatpush1.msra.mxu0 0.0
    %270 = vmatprep.subr.mxu0 0.0
    %271 = vmatpush1.msra.mxu0 0.0
    %272 = vmatprep.subr.mxu0 0.0
    %273 = vmatpush1.msra.mxu0 0.0
    %274 = vmatprep.subr.mxu0 0.0
    %275 = vmatpush1.msra.mxu0 0.0
    %276 = vmatprep.mubr.f32.mxu0 0.0
    %277 = vmatmul.mubr.f32.gmra.mrb[0].mxu0 %v194
    %v278 = vpop.f32.mrb[0].mxu0
    %v279 = vadd.f32 0.0, %v278
    %v280 = vpop.f32.mrb[0].mxu0
    %281 = vdwg.mxu0
    %v283 = vlaneseq
    %v284 = vshrl.u32 %v283, 7
    %v285 = vsub.s32 0, %v284
    %v286 = vrot.slane %v211, %v285
    %v288 = vadd.f32 %v286, %v279
    %v289 = vmax.f32 %v288, 0.0
    %v290 = vld [vmem:[#allocation8] sm:$0xff]
    %v291 = vld [vmem:[#allocation8 + $0x8] sm:$0xff]
    %v292 = vld [vmem:[#allocation8 + $0x10] sm:$0xff]
    %v293 = vld [vmem:[#allocation8 + $0x18] sm:$0xff]
    %v294 = vld [vmem:[#allocation8 + $0x20] sm:$0xff]
    %v295 = vld [vmem:[#allocation8 + $0x28] sm:$0xff]
    %v296 = vld [vmem:[#allocation8 + $0x30] sm:$0xff]
    %v297 = vld [vmem:[#allocation8 + $0x38] sm:$0xff]
    %v298 = vld [vmem:[#allocation8 + $0x40] sm:$0xff]
    %v299 = vld [vmem:[#allocation8 + $0x48] sm:$0xff]
    %v300 = vld [vmem:[#allocation8 + $0x50] sm:$0xff]
    %v301 = vld [vmem:[#allocation8 + $0x58] sm:$0xff]
    %v302 = vld [vmem:[#allocation8 + $0x60] sm:$0xff]
    %v303 = vld [vmem:[#allocation8 + $0x68] sm:$0xff]
    %v304 = vld [vmem:[#allocation8 + $0x70] sm:$0xff]
    %v305 = vld [vmem:[#allocation8 + $0x78] sm:$0xff]
    %v306 = vld [vmem:[%s6] sm:$0x1]
    %307 = vmatprep.subr.mxu0 0.0
    %308 = vmatpush1.msra.mxu0 %v290
    %309 = vmatprep.subr.mxu0 0.0
    %310 = vmatpush1.msra.mxu0 %v291
    %311 = vmatprep.subr.mxu0 0.0
    %312 = vmatpush1.msra.mxu0 %v292
    %313 = vmatprep.subr.mxu0 0.0
    %314 = vmatpush1.msra.mxu0 %v293
    %315 = vmatprep.subr.mxu0 0.0
    %316 = vmatpush1.msra.mxu0 %v294
    %317 = vmatprep.subr.mxu0 0.0
    %318 = vmatpush1.msra.mxu0 %v295
    %319 = vmatprep.subr.mxu0 0.0
    %320 = vmatpush1.msra.mxu0 %v296
    %321 = vmatprep.subr.mxu0 0.0
    %322 = vmatpush1.msra.mxu0 %v297
    %323 = vmatprep.subr.mxu0 0.0
    %324 = vmatpush1.msra.mxu0 %v298
    %325 = vmatprep.subr.mxu0 0.0
    %326 = vmatpush1.msra.mxu0 %v299
    %327 = vmatprep.subr.mxu0 0.0
    %328 = vmatpush1.msra.mxu0 %v300
    %329 = vmatprep.subr.mxu0 0.0
    %330 = vmatpush1.msra.mxu0 %v301
    %331 = vmatprep.subr.mxu0 0.0
    %332 = vmatpush1.msra.mxu0 %v302
    %333 = vmatprep.subr.mxu0 0.0
    %334 = vmatpush1.msra.mxu0 %v303
    %335 = vmatprep.subr.mxu0 0.0
    %336 = vmatpush1.msra.mxu0 %v304
    %337 = vmatprep.subr.mxu0 0.0
    %338 = vmatpush1.msra.mxu0 %v305
    %339 = vmatprep.subr.mxu0 0.0
    %340 = vmatpush1.msra.mxu0 0.0
    %341 = vmatprep.subr.mxu0 0.0
    %342 = vmatpush1.msra.mxu0 0.0
    %343 = vmatprep.subr.mxu0 0.0
    %344 = vmatpush1.msra.mxu0 0.0
    %345 = vmatprep.subr.mxu0 0.0
    %346 = vmatpush1.msra.mxu0 0.0
    %347 = vmatprep.subr.mxu0 0.0
    %348 = vmatpush1.msra.mxu0 0.0
    %349 = vmatprep.subr.mxu0 0.0
    %350 = vmatpush1.msra.mxu0 0.0
    %351 = vmatprep.subr.mxu0 0.0
    %352 = vmatpush1.msra.mxu0 0.0
    %353 = vmatprep.subr.mxu0 0.0
    %354 = vmatpush1.msra.mxu0 0.0
    %355 = vmatprep.subr.mxu0 0.0
    %356 = vmatpush1.msra.mxu0 0.0
    %357 = vmatprep.subr.mxu0 0.0
    %358 = vmatpush1.msra.mxu0 0.0
    %359 = vmatprep.subr.mxu0 0.0
    %360 = vmatpush1.msra.mxu0 0.0
    %361 = vmatprep.subr.mxu0 0.0
    %362 = vmatpush1.msra.mxu0 0.0
    %363 = vmatprep.subr.mxu0 0.0
    %364 = vmatpush1.msra.mxu0 0.0
    %365 = vmatprep.subr.mxu0 0.0
    %366 = vmatpush1.msra.mxu0 0.0
    %367 = vmatprep.subr.mxu0 0.0
    %368 = vmatpush1.msra.mxu0 0.0
    %369 = vmatprep.subr.mxu0 0.0
    %370 = vmatpush1.msra.mxu0 0.0
    %371 = vmatprep.mubr.f32.mxu0 0.0
    %372 = vmatmul.mubr.f32.gmra.mrb[0].mxu0 %v289
    %v373 = vpop.f32.mrb[0].mxu0
    %v374 = vadd.f32 0.0, %v373
    %v375 = vpop.f32.mrb[0].mxu0
    %376 = vdwg.mxu0
    %v378 = vlaneseq
    %v379 = vshrl.u32 %v378, 7
    %v380 = vsub.s32 0, %v379
    %v381 = vrot.slane %v306, %v380
    %v383 = vadd.f32 %v381, %v374
    %v384 = vmax.f32 %v383, 0.0
    %v385 = vld [vmem:[#allocation10] sm:$0xff]
    %v386 = vld [vmem:[#allocation10 + $0x8] sm:$0xff]
    %v387 = vld [vmem:[#allocation10 + $0x10] sm:$0xff]
    %v388 = vld [vmem:[#allocation10 + $0x18] sm:$0xff]
    %v389 = vld [vmem:[#allocation10 + $0x20] sm:$0xff]
    %v390 = vld [vmem:[#allocation10 + $0x28] sm:$0xff]
    %v391 = vld [vmem:[#allocation10 + $0x30] sm:$0xff]
    %v392 = vld [vmem:[#allocation10 + $0x38] sm:$0xff]
    %v393 = vld [vmem:[#allocation10 + $0x40] sm:$0xff]
    %v394 = vld [vmem:[#allocation10 + $0x48] sm:$0xff]
    %v395 = vld [vmem:[#allocation10 + $0x50] sm:$0xff]
    %v396 = vld [vmem:[#allocation10 + $0x58] sm:$0xff]
    %v397 = vld [vmem:[#allocation10 + $0x60] sm:$0xff]
    %v398 = vld [vmem:[#allocation10 + $0x68] sm:$0xff]
    %v399 = vld [vmem:[#allocation10 + $0x70] sm:$0xff]
    %v400 = vld [vmem:[#allocation10 + $0x78] sm:$0xff]
    %v401 = vld [vmem:[%s8] sm:$0x1]
    %402 = vmatprep.subr.mxu0 0.0
    %403 = vmatpush1.msra.mxu0 %v385
    %404 = vmatprep.subr.mxu0 0.0
    %405 = vmatpush1.msra.mxu0 %v386
    %406 = vmatprep.subr.mxu0 0.0
    %407 = vmatpush1.msra.mxu0 %v387
    %408 = vmatprep.subr.mxu0 0.0
    %409 = vmatpush1.msra.mxu0 %v388
    %410 = vmatprep.subr.mxu0 0.0
    %411 = vmatpush1.msra.mxu0 %v389
    %412 = vmatprep.subr.mxu0 0.0
    %413 = vmatpush1.msra.mxu0 %v390
    %414 = vmatprep.subr.mxu0 0.0
    %415 = vmatpush1.msra.mxu0 %v391
    %416 = vmatprep.subr.mxu0 0.0
    %417 = vmatpush1.msra.mxu0 %v392
    %418 = vmatprep.subr.mxu0 0.0
    %419 = vmatpush1.msra.mxu0 %v393
    %420 = vmatprep.subr.mxu0 0.0
    %421 = vmatpush1.msra.mxu0 %v394
    %422 = vmatprep.subr.mxu0 0.0
    %423 = vmatpush1.msra.mxu0 %v395
    %424 = vmatprep.subr.mxu0 0.0
    %425 = vmatpush1.msra.mxu0 %v396
    %426 = vmatprep.subr.mxu0 0.0
    %427 = vmatpush1.msra.mxu0 %v397
    %428 = vmatprep.subr.mxu0 0.0
    %429 = vmatpush1.msra.mxu0 %v398
    %430 = vmatprep.subr.mxu0 0.0
    %431 = vmatpush1.msra.mxu0 %v399
    %432 = vmatprep.subr.mxu0 0.0
    %433 = vmatpush1.msra.mxu0 %v400
    %434 = vmatprep.subr.mxu0 0.0
    %435 = vmatpush1.msra.mxu0 0.0
    %436 = vmatprep.subr.mxu0 0.0
    %437 = vmatpush1.msra.mxu0 0.0
    %438 = vmatprep.subr.mxu0 0.0
    %439 = vmatpush1.msra.mxu0 0.0
    %440 = vmatprep.subr.mxu0 0.0
    %441 = vmatpush1.msra.mxu0 0.0
    %442 = vmatprep.subr.mxu0 0.0
    %443 = vmatpush1.msra.mxu0 0.0
    %444 = vmatprep.subr.mxu0 0.0
    %445 = vmatpush1.msra.mxu0 0.0
    %446 = vmatprep.subr.mxu0 0.0
    %447 = vmatpush1.msra.mxu0 0.0
    %448 = vmatprep.subr.mxu0 0.0
    %449 = vmatpush1.msra.mxu0 0.0
    %450 = vmatprep.subr.mxu0 0.0
    %451 = vmatpush1.msra.mxu0 0.0
    %452 = vmatprep.subr.mxu0 0.0
    %453 = vmatpush1.msra.mxu0 0.0
    %454 = vmatprep.subr.mxu0 0.0
    %455 = vmatpush1.msra.mxu0 0.0
    %456 = vmatprep.subr.mxu0 0.0
    %457 = vmatpush1.msra.mxu0 0.0
    %458 = vmatprep.subr.mxu0 0.0
    %459 = vmatpush1.msra.mxu0 0.0
    %460 = vmatprep.subr.mxu0 0.0
    %461 = vmatpush1.msra.mxu0 0.0
    %462 = vmatprep.subr.mxu0 0.0
    %463 = vmatpush1.msra.mxu0 0.0
    %464 = vmatprep.subr.mxu0 0.0
    %465 = vmatpush1.msra.mxu0 0.0
    %466 = vmatprep.mubr.f32.mxu0 0.0
    %467 = vmatmul.mubr.f32.gmra.mrb[0].mxu0 %v384
    %v468 = vpop.f32.mrb[0].mxu0
    %v469 = vadd.f32 0.0, %v468
    %v470 = vpop.f32.mrb[0].mxu0
    %471 = vdwg.mxu0
    %v473 = vlaneseq
    %v474 = vshrl.u32 %v473, 7
    %v475 = vsub.s32 0, %v474
    %v476 = vrot.slane %v401, %v475
    %v478 = vadd.f32 %v476, %v469
    %479 = vst [vmem:[#allocation11] sm:$0xff] %v478
    // Predicated region
    $region58: #{tpu_custom_call.1} parent=1 // pred_check
      _
    $region59: #{tpu_custom_call.1} parent=1 // pred_check_branch
      %481 = sbr.rel (0) target = $region61
    $region60: #{tpu_custom_call.1} parent=1 // pred_region
      %s483 = ssub.s32 128, 128
      %484 = vsyncadd [#allocation4], %s483
      %s486 = sshll.u32 [#allocation11], 4
      %s487 = int_to_ptr.vmem [resolvable:$true] %s486
      %489 = dma.vmem_to_hbm [thread:$0]  %s487, 128, %s9, [#allocation4]
    $region61: #{tpu_custom_call.1} parent=1 // pred_fallthru
      _
    // Predicated region
    $region62: #{tpu_custom_call.1} parent=1 // pred_check
      _
    $region63: #{tpu_custom_call.1} parent=1 // pred_check_branch
      %491 = sbr.rel (0) target = $region65
    $region64: #{tpu_custom_call.1} parent=1 // pred_region
      %492 = dma.done [#allocation4], 128
    $region65: #{tpu_custom_call.1} parent=1 // pred_fallthru
      _
    %493 = vsyncpa [#allocation3], 1
    %494 = vsyncpa [#allocation6], 1
    %495 = vsyncpa [#allocation9], 1
    %496 = vsyncpa [#allocation4], 1

</llo_original>
